<compile_context>
chip_gen: v7x
topology: tpu7x:2x2x1
jax: 0.10.0
libtpu: 0.0.40
codegen_flags: <defaults>
</compile_context>

<pallas_src>
from functools import partial

import jax
import jax.numpy as jnp
import numpy as np
from jax import lax
from jax.experimental import pallas as pl
from jax.experimental.pallas import tpu as pltpu


def stream_kernel(x_ref, sse_s_ref, sse_t_ref, w_sse_ref, b_sse_ref,
                  w3_ref, t2_ref, out_ref, *, H, W):
    Pp = x_ref.shape[2]          # lane-padded flattened (H+2)*(W+2)
    Wp = W + 2

    x = x_ref[0].astype(jnp.float32)             # (C, Pp); zero outside the real image

    # ---- SSE branch: BN -> global avg pool -> 1x1 conv -> sigmoid -> scale ----------
    # Padding columns of x are zero, so mean_valid(bn) = sse_s * sum(x)/(H*W) + sse_t.
    gap = sse_s_ref[...] * (jnp.sum(x, axis=1, keepdims=True) * (1.0 / (H * W))) \
        + sse_t_ref[...]                          # (C, 1)
    logits = jnp.dot(w_sse_ref[...], gap,
                     preferred_element_type=jnp.float32) + b_sse_ref[...]   # (Co, 1)
    gate = jax.nn.sigmoid(logits)                 # (Co, 1)
    bn = x * sse_s_ref[...] + sse_t_ref[...]      # (C, Pp)  f32 elementwise
    sse_out = bn * gate                           # requires Co == C (module semantics)

    # ---- Fuse branch: 3x3 conv (1x1 conv folded into centre tap) as ONE matmul ------
    taps = []
    for dy in (-1, 0, 1):
        for dx in (-1, 0, 1):
            off = dy * Wp + dx                    # flat offset of tap (dy, dx)
            if off == 0:
                taps.append(x)
            else:
                taps.append(pltpu.roll(x, shift=(-off) % Pp, axis=1))
    patches = jnp.concatenate(taps, axis=0).astype(jnp.bfloat16)            # (9C, Pp)
    fuse = lax.dot_general(w3_ref[...], patches, (((1,), (0,)), ((), ())),
                           preferred_element_type=jnp.float32) + t2_ref[...]  # (Co, Pp)

    # ---- Stream: add branches, SiLU --------------------------------------------------
    c = sse_out + fuse
    out_ref[0] = (c * jax.nn.sigmoid(c)).astype(out_ref.dtype)


def stream_forward(x_nchw, params):
    N, C, H, W = x_nchw.shape
    Co = params["w3cat"].shape[0]
    assert Co == C, "SSEBlock's `bn * gate` broadcast requires out_channels == in_channels"

    Hp, Wp = H + 2, W + 2
    P = Hp * Wp
    Pp = ((P + 127) // 128) * 128                 # lane-dense (multiple of 128)

    xpad = jnp.pad(x_nchw, ((0, 0), (0, 0), (1, 1), (1, 1)))      # (N, C, H+2, W+2)
    xflat = xpad.reshape(N, C, P)
    xflat = jnp.pad(xflat, ((0, 0), (0, 0), (0, Pp - P))).astype(jnp.bfloat16)

    out_flat = pl.pallas_call(
        partial(stream_kernel, H=H, W=W),
        out_shape=jax.ShapeDtypeStruct((N, Co, Pp), jnp.float32),
        grid=(N,),
        in_specs=[
            pl.BlockSpec((1, C, Pp), lambda n: (n, 0, 0)),   # flattened padded image (bf16)
            pl.BlockSpec((C, 1), lambda n: (0, 0)),          # SSE BN scale (f32)
            pl.BlockSpec((C, 1), lambda n: (0, 0)),          # SSE BN shift (f32)
            pl.BlockSpec((Co, C), lambda n: (0, 0)),         # SSE 1x1 conv weight (f32)
            pl.BlockSpec((Co, 1), lambda n: (0, 0)),         # SSE 1x1 conv bias (f32)
            pl.BlockSpec((Co, 9 * C), lambda n: (0, 0)),     # fused 3x3(+1x1) weight (bf16)
            pl.BlockSpec((Co, 1), lambda n: (0, 0)),         # fused BN shift t1+t2 (f32)
        ],
        out_specs=pl.BlockSpec((1, Co, Pp), lambda n: (n, 0, 0)),
        compiler_params=pltpu.CompilerParams(
            dimension_semantics=("parallel",),
            vmem_limit_bytes=32 * 1024 * 1024),
    )(xflat, params["sse_s"], params["sse_t"], params["w_sse"],
      params["b_sse"], params["w3cat"], params["t2"])

    # drop the lane pad and the zero-padding ring -> PyTorch NCHW output
    out = out_flat[:, :, :P].reshape(N, Co, Hp, Wp)[:, :, 1:H + 1, 1:W + 1]
    return out


def make_params(key, C, Co):
    eps = 1e-5
    ks = jax.random.split(key, 7)
    # torch-equivalent raw parameters
    w_sse = jax.random.normal(ks[0], (Co, C)) * 0.1       # SSE 1x1 conv weight (Co,C,1,1)
    b_sse = jax.random.normal(ks[1], (Co,)) * 0.1         # SSE 1x1 conv bias
    w1 = jax.random.normal(ks[2], (Co, C)) * 0.1          # fuse 1x1 conv (bias=False)
    w3 = jax.random.normal(ks[3], (Co, C, 3, 3)) * 0.1    # fuse 3x3 conv (bias=False)

    def bn_params(k, n):
        k1, k2, k3, k4 = jax.random.split(k, 4)
        gamma = 1.0 + 0.1 * jax.random.normal(k1, (n,))
        beta = 0.1 * jax.random.normal(k2, (n,))
        rm = 0.1 * jax.random.normal(k3, (n,))
        rv = jax.random.uniform(k4, (n,), minval=0.5, maxval=1.5)
        return gamma, beta, rm, rv

    g0, b0, m0, v0 = bn_params(ks[4], C)    # SSEBlock.norm
    g1, b1, m1, v1 = bn_params(ks[5], Co)   # FuseBlock.conv1.bn
    g2, b2, m2, v2 = bn_params(ks[6], Co)   # FuseBlock.conv2.bn

    sse_s = g0 / jnp.sqrt(v0 + eps)
    sse_t = b0 - m0 * sse_s
    s1 = g1 / jnp.sqrt(v1 + eps)
    t1 = b1 - m1 * s1
    s2 = g2 / jnp.sqrt(v2 + eps)
    t2 = b2 - m2 * s2

    # Fold BN scales into conv weights, then fold the 1x1 conv into the 3x3 centre tap.
    w1f = w1 * s1[:, None]                                # (Co, C)
    w3f = w3 * s2[:, None, None, None]                    # (Co, C, 3, 3)
    w3f = w3f.at[:, :, 1, 1].add(w1f)                     # centre-tap fold
    t_fuse = t1 + t2                                      # combined BN shifts

    # kernel layout: (Co, 9*C), tap-major (kh,kw) / channel-minor, bf16 for the MXU
    w3_k = jnp.transpose(w3f, (2, 3, 1, 0)).reshape(9 * C, Co)   # (kh,kw,C,Co) -> (9C,Co)
    w3cat = jnp.transpose(w3_k).astype(jnp.bfloat16)             # (Co, 9C)

    return dict(
        sse_s=sse_s.reshape(C, 1).astype(jnp.float32),
        sse_t=sse_t.reshape(C, 1).astype(jnp.float32),
        w_sse=w_sse.astype(jnp.float32),                  # (Co, C)
        b_sse=b_sse.reshape(Co, 1).astype(jnp.float32),
        w3cat=w3cat,                                      # (Co, 9C) bf16, BN+1x1 folded
        t2=t_fuse.reshape(Co, 1).astype(jnp.float32),
    )


def reference(x_nchw, params):
    # pure-JAX reference using the SAME bf16-rounded operands as the kernel, but an
    # independent conv implementation (lax.conv_general_dilated) and NCHW math.
    N, C, H, W = x_nchw.shape
    Co = params["w3cat"].shape[0]
    x = x_nchw.astype(jnp.bfloat16).astype(jnp.float32)

    sse_s = params["sse_s"].reshape(1, C, 1, 1)
    sse_t = params["sse_t"].reshape(1, C, 1, 1)
    bn = x * sse_s + sse_t
    gap = jnp.mean(bn, axis=(2, 3), keepdims=True)                     # (N, C, 1, 1)
    logits = jnp.einsum("oc,ncij->noij", params["w_sse"], gap,
                        precision=lax.Precision.HIGHEST) + params["b_sse"].reshape(1, Co, 1, 1)
    sse = bn * jax.nn.sigmoid(logits)

    w_oihw = params["w3cat"].astype(jnp.float32).reshape(Co, 3, 3, C).transpose(0, 3, 1, 2)
    conv = lax.conv_general_dilated(
        x, w_oihw, window_strides=(1, 1), padding="SAME",
        dimension_numbers=("NCHW", "OIHW", "NCHW"),
        precision=lax.Precision.HIGHEST) + params["t2"].reshape(1, Co, 1, 1)

    c = sse + conv
    return c * jax.nn.sigmoid(c)


if __name__ == "__main__":
    N, C, H, W = 2, 8, 16, 16
    Co = C  # SSEBlock's `bn * gate` broadcast requires out_channels == in_channels

    key = jax.random.PRNGKey(0)
    kx, kp = jax.random.split(key)
    x_nchw = jax.random.normal(kx, (N, C, H, W), dtype=jnp.float32)   # PyTorch layout
    params = make_params(kp, C, Co)

    out = jax.jit(stream_forward)(x_nchw, params)
    out = jax.block_until_ready(out)

    ref = reference(x_nchw, params)
    np.testing.assert_allclose(np.asarray(out), np.asarray(ref), rtol=1e-3, atol=1e-3)
    print("KERNEL_OK")
</pallas_src>

<mosaic_0001>
module attributes {stable_mosaic.version = 11 : i64} {
  func.func @stream_kernel(%arg0: i32, %arg1: memref<1x8x384xbf16, #tpu.memory_space<vmem>>, %arg2: memref<8x1xf32, #tpu.memory_space<vmem>>, %arg3: memref<8x1xf32, #tpu.memory_space<vmem>>, %arg4: memref<8x8xf32, #tpu.memory_space<vmem>>, %arg5: memref<8x1xf32, #tpu.memory_space<vmem>>, %arg6: memref<8x72xbf16, #tpu.memory_space<vmem>>, %arg7: memref<8x1xf32, #tpu.memory_space<vmem>>, %arg8: memref<1x8x384xf32, #tpu.memory_space<vmem>>) attributes {dimension_semantics = [#tpu.dimension_semantics<parallel>], iteration_bounds = array<i64: 2>, scalar_prefetch = 0 : i64, scratch_operands = 0 : i64, tpu.core_type = #tpu.core_type<tc>, window_params = [{transform_indices = @transform_0, window_bounds = array<i64: 1, 8, 384>}, {pipeline_mode = #tpu.pipeline_mode<synchronous>, transform_indices = @transform_1, window_bounds = array<i64: 8, 1>}, {pipeline_mode = #tpu.pipeline_mode<synchronous>, transform_indices = @transform_2, window_bounds = array<i64: 8, 1>}, {pipeline_mode = #tpu.pipeline_mode<synchronous>, transform_indices = @transform_3, window_bounds = array<i64: 8, 8>}, {pipeline_mode = #tpu.pipeline_mode<synchronous>, transform_indices = @transform_4, window_bounds = array<i64: 8, 1>}, {pipeline_mode = #tpu.pipeline_mode<synchronous>, transform_indices = @transform_5, window_bounds = array<i64: 8, 72>}, {pipeline_mode = #tpu.pipeline_mode<synchronous>, transform_indices = @transform_6, window_bounds = array<i64: 8, 1>}, {transform_indices = @transform_7, window_bounds = array<i64: 1, 8, 384>}]} {
    %c0 = arith.constant 0 : index
    %c0_0 = arith.constant 0 : index
    %c0_1 = arith.constant 0 : index
    %0 = vector.load %arg1[%c0, %c0_0, %c0_1] : memref<1x8x384xbf16, #tpu.memory_space<vmem>>, vector<1x8x384xbf16>
    %1 = vector.shape_cast %0 : vector<1x8x384xbf16> to vector<8x384xbf16>
    %2 = arith.extf %1 : vector<8x384xbf16> to vector<8x384xf32>
    %c0_2 = arith.constant 0 : index
    %c0_3 = arith.constant 0 : index
    %3 = vector.load %arg2[%c0_2, %c0_3] : memref<8x1xf32, #tpu.memory_space<vmem>>, vector<8x1xf32>
    %cst = arith.constant dense<0.000000e+00> : vector<8xf32>
    %4 = vector.multi_reduction <add>, %2, %cst [1] : vector<8x384xf32> to vector<8xf32>
    %5 = vector.shape_cast %4 : vector<8xf32> to vector<8x1xf32>
    %cst_4 = arith.constant 3.906250e-03 : f32
    %6 = vector.broadcast %cst_4 : f32 to vector<8x1xf32>
    %7 = arith.mulf %5, %6 : vector<8x1xf32>
    %8 = arith.mulf %3, %7 : vector<8x1xf32>
    %c0_5 = arith.constant 0 : index
    %c0_6 = arith.constant 0 : index
    %9 = vector.load %arg3[%c0_5, %c0_6] : memref<8x1xf32, #tpu.memory_space<vmem>>, vector<8x1xf32>
    %10 = arith.addf %8, %9 : vector<8x1xf32>
    %c0_7 = arith.constant 0 : index
    %c0_8 = arith.constant 0 : index
    %11 = vector.load %arg4[%c0_7, %c0_8] : memref<8x8xf32, #tpu.memory_space<vmem>>, vector<8x8xf32>
    %cst_9 = arith.constant dense<0.000000e+00> : vector<8x1xf32>
    %12 = tpu.matmul %11, %10, %cst_9 {dimension_numbers = #tpu.dot_dimension_numbers<[1], [0], [0], [1], [0, 0, 1, 1], [], []>} : vector<8x8xf32>, vector<8x1xf32>, vector<8x1xf32> -> vector<8x1xf32>
    %c0_10 = arith.constant 0 : index
    %c0_11 = arith.constant 0 : index
    %13 = vector.load %arg5[%c0_10, %c0_11] : memref<8x1xf32, #tpu.memory_space<vmem>>, vector<8x1xf32>
    %14 = arith.addf %12, %13 : vector<8x1xf32>
    %15 = arith.negf %14 : vector<8x1xf32>
    %16 = math.exp %15 : vector<8x1xf32>
    %cst_12 = arith.constant 1.000000e+00 : f32
    %17 = vector.broadcast %cst_12 : f32 to vector<8x1xf32>
    %18 = arith.addf %17, %16 : vector<8x1xf32>
    %19 = arith.divf %17, %18 : vector<8x1xf32>
    %c0_13 = arith.constant 0 : index
    %c0_14 = arith.constant 0 : index
    %20 = vector.load %arg2[%c0_13, %c0_14] : memref<8x1xf32, #tpu.memory_space<vmem>>, vector<8x1xf32>
    %21 = vector.broadcast %20 : vector<8x1xf32> to vector<8x384xf32>
    %22 = arith.mulf %2, %21 : vector<8x384xf32>
    %c0_15 = arith.constant 0 : index
    %c0_16 = arith.constant 0 : index
    %23 = vector.load %arg3[%c0_15, %c0_16] : memref<8x1xf32, #tpu.memory_space<vmem>>, vector<8x1xf32>
    %24 = vector.broadcast %23 : vector<8x1xf32> to vector<8x384xf32>
    %25 = arith.addf %22, %24 : vector<8x384xf32>
    %26 = vector.broadcast %19 : vector<8x1xf32> to vector<8x384xf32>
    %27 = arith.mulf %25, %26 : vector<8x384xf32>
    %c19_i32 = arith.constant 19 : i32
    %28 = tpu.dynamic_rotate %2 by %c19_i32 dim 1 : vector<8x384xf32>, i32 -> vector<8x384xf32>
    %c18_i32 = arith.constant 18 : i32
    %29 = tpu.dynamic_rotate %2 by %c18_i32 dim 1 : vector<8x384xf32>, i32 -> vector<8x384xf32>
    %c17_i32 = arith.constant 17 : i32
    %30 = tpu.dynamic_rotate %2 by %c17_i32 dim 1 : vector<8x384xf32>, i32 -> vector<8x384xf32>
    %c1_i32 = arith.constant 1 : i32
    %31 = tpu.dynamic_rotate %2 by %c1_i32 dim 1 : vector<8x384xf32>, i32 -> vector<8x384xf32>
    %c383_i32 = arith.constant 383 : i32
    %32 = tpu.dynamic_rotate %2 by %c383_i32 dim 1 : vector<8x384xf32>, i32 -> vector<8x384xf32>
    %c367_i32 = arith.constant 367 : i32
    %33 = tpu.dynamic_rotate %2 by %c367_i32 dim 1 : vector<8x384xf32>, i32 -> vector<8x384xf32>
    %c366_i32 = arith.constant 366 : i32
    %34 = tpu.dynamic_rotate %2 by %c366_i32 dim 1 : vector<8x384xf32>, i32 -> vector<8x384xf32>
    %c365_i32 = arith.constant 365 : i32
    %35 = tpu.dynamic_rotate %2 by %c365_i32 dim 1 : vector<8x384xf32>, i32 -> vector<8x384xf32>
    %36 = tpu.concatenate %28, %29, %30, %31, %2, %32, %33, %34, %35 in 0 : vector<8x384xf32>, vector<8x384xf32>, vector<8x384xf32>, vector<8x384xf32>, vector<8x384xf32>, vector<8x384xf32>, vector<8x384xf32>, vector<8x384xf32>, vector<8x384xf32> -> vector<72x384xf32>
    %37 = arith.truncf %36 : vector<72x384xf32> to vector<72x384xbf16>
    %c0_17 = arith.constant 0 : index
    %c0_18 = arith.constant 0 : index
    %38 = vector.load %arg6[%c0_17, %c0_18] : memref<8x72xbf16, #tpu.memory_space<vmem>>, vector<8x72xbf16>
    %cst_19 = arith.constant dense<0.000000e+00> : vector<8x384xf32>
    %39 = tpu.matmul %38, %37, %cst_19 {dimension_numbers = #tpu.dot_dimension_numbers<[1], [0], [0], [1], [0, 0, 1, 1], [], []>} : vector<8x72xbf16>, vector<72x384xbf16>, vector<8x384xf32> -> vector<8x384xf32>
    %c0_20 = arith.constant 0 : index
    %c0_21 = arith.constant 0 : index
    %40 = vector.load %arg7[%c0_20, %c0_21] : memref<8x1xf32, #tpu.memory_space<vmem>>, vector<8x1xf32>
    %41 = vector.broadcast %40 : vector<8x1xf32> to vector<8x384xf32>
    %42 = arith.addf %39, %41 : vector<8x384xf32>
    %43 = arith.addf %27, %42 : vector<8x384xf32>
    %44 = arith.negf %43 : vector<8x384xf32>
    %45 = math.exp %44 : vector<8x384xf32>
    %cst_22 = arith.constant 1.000000e+00 : f32
    %46 = vector.broadcast %cst_22 : f32 to vector<8x384xf32>
    %47 = arith.addf %46, %45 : vector<8x384xf32>
    %48 = arith.divf %46, %47 : vector<8x384xf32>
    %49 = arith.mulf %43, %48 : vector<8x384xf32>
    %c0_23 = arith.constant 0 : index
    %c0_24 = arith.constant 0 : index
    %c0_25 = arith.constant 0 : index
    %50 = vector.load %arg8[%c0_23, %c0_24, %c0_25] : memref<1x8x384xf32, #tpu.memory_space<vmem>>, vector<1x8x384xf32>
    %51 = vector.shape_cast %50 : vector<1x8x384xf32> to vector<8x384xf32>
    %52 = vector.shape_cast %49 : vector<8x384xf32> to vector<1x8x384xf32>
    tpu.vector_store %arg8[%c0_23, %c0_24, %c0_25], %52 {strides = array<i32>} : memref<1x8x384xf32, #tpu.memory_space<vmem>>, vector<1x8x384xf32>,
    return
  }
  func.func @transform_0(%arg0: i32) -> (i32, i32, i32) {
    %c0_i32 = arith.constant 0 : i32
    %c0_i32_0 = arith.constant 0 : i32
    %c0_i32_1 = arith.constant 0 : i32
    return %arg0, %c0_i32, %c0_i32_0 : i32, i32, i32
  }
  func.func @transform_1(%arg0: i32) -> (i32, i32) {
    %c0_i32 = arith.constant 0 : i32
    %c0_i32_0 = arith.constant 0 : i32
    %c0_i32_1 = arith.constant 0 : i32
    return %c0_i32, %c0_i32_0 : i32, i32
  }
  func.func @transform_2(%arg0: i32) -> (i32, i32) {
    %c0_i32 = arith.constant 0 : i32
    %c0_i32_0 = arith.constant 0 : i32
    %c0_i32_1 = arith.constant 0 : i32
    return %c0_i32, %c0_i32_0 : i32, i32
  }
  func.func @transform_3(%arg0: i32) -> (i32, i32) {
    %c0_i32 = arith.constant 0 : i32
    %c0_i32_0 = arith.constant 0 : i32
    %c0_i32_1 = arith.constant 0 : i32
    return %c0_i32, %c0_i32_0 : i32, i32
  }
  func.func @transform_4(%arg0: i32) -> (i32, i32) {
    %c0_i32 = arith.constant 0 : i32
    %c0_i32_0 = arith.constant 0 : i32
    %c0_i32_1 = arith.constant 0 : i32
    return %c0_i32, %c0_i32_0 : i32, i32
  }
  func.func @transform_5(%arg0: i32) -> (i32, i32) {
    %c0_i32 = arith.constant 0 : i32
    %c0_i32_0 = arith.constant 0 : i32
    %c0_i32_1 = arith.constant 0 : i32
    return %c0_i32, %c0_i32_0 : i32, i32
  }
  func.func @transform_6(%arg0: i32) -> (i32, i32) {
    %c0_i32 = arith.constant 0 : i32
    %c0_i32_0 = arith.constant 0 : i32
    %c0_i32_1 = arith.constant 0 : i32
    return %c0_i32, %c0_i32_0 : i32, i32
  }
  func.func @transform_7(%arg0: i32) -> (i32, i32, i32) {
    %c0_i32 = arith.constant 0 : i32
    %c0_i32_0 = arith.constant 0 : i32
    %c0_i32_1 = arith.constant 0 : i32
    return %arg0, %c0_i32, %c0_i32_0 : i32, i32, i32
  }
}

</mosaic_0001>

<llo_original>
// kernel: stream_forward.1
$region0: #{stream_forward.1}
  #allocation0 [shape = 'u32[]', space=smem, size = 0x4, offset = 0x4, fixed_abs, tag = 'smem constant byte address 0x4 - core index']
  #allocation1 [shape = 'u32[144,128]{1,0:T(1,128)}', space=vmem, size = 0x12000, scoped, tag = 'internal scratch']
  %s0 = inlined_call_operand.vmem [shape: bf16[2,8,384], index: 0, kind: input, shape index: {}]
  %s1 = inlined_call_operand.vmem [shape: f32[8,1], index: 1, kind: input, shape index: {}]
  %s2 = inlined_call_operand.vmem [shape: f32[8,1], index: 2, kind: input, shape index: {}]
  %s3 = inlined_call_operand.vmem [shape: f32[8,8], index: 3, kind: input, shape index: {}]
  %s4 = inlined_call_operand.vmem [shape: f32[8,1], index: 4, kind: input, shape index: {}]
  %s5 = inlined_call_operand.vmem [shape: bf16[8,72], index: 5, kind: input, shape index: {}]
  %s6 = inlined_call_operand.vmem [shape: f32[8,1], index: 6, kind: input, shape index: {}]
  %s7 = inlined_call_operand.vmem [shape: f32[2,8,384], index: 7, kind: output, shape index: {}]
  %s8 = sld [smem:[#allocation0]]
  $region61: #{stream_forward.1} parent=0
    _
  %s10 = ssub.s32 1, %s8
  %s11 = scalar_select 0, %s10, %s8
  loop: start=0, step=1, limit=4
  $region2: #{stream_forward.1} parent=0 // loop_pre_header
    _
  $region3: #{stream_forward.1} parent=0 // loop_header
    %s13 = sphi 0, %s17
    %p14 = scmp.ge.s32.totalorder %s13, 4
    %s23 = sphi 0, %s25
    %s26 = sphi 0, %s23
    %s27 = sphi 0, %s26
    %s43 = sphi 0, %s27
    %s47 = sphi 0, %s47
    %s49 = sphi 0, %s47
    %s50 = sphi 0, %s49
    %s64 = sphi 0, %s50
    %s68 = sphi 0, %s68
    %s70 = sphi 0, %s68
    %s71 = sphi 0, %s70
    %s85 = sphi 0, %s71
    %s89 = sphi 0, %s89
    %s91 = sphi 0, %s89
    %s92 = sphi 0, %s91
    %s106 = sphi 0, %s92
    %s110 = sphi 0, %s110
    %s112 = sphi 0, %s110
    %s113 = sphi 0, %s112
    %s127 = sphi 0, %s113
    %s131 = sphi 0, %s131
    %s133 = sphi 0, %s131
    %s134 = sphi 0, %s133
    %s148 = sphi 0, %s134
    %s152 = sphi 0, %s152
    %s154 = sphi 0, %s152
    %s155 = sphi 0, %s154
    %s169 = sphi 0, %s155
    %s175 = sphi 0, %s177
    %s178 = sphi 0, %s175
    %s179 = sphi 0, %s178
    %s195 = sphi 0, %s179
  $region4: #{stream_forward.1} parent=0 // loop_header_branch
    %16 = sbr.rel (%p14) target = $region8
  $region5: #{stream_forward.1} parent=0 // loop_body
    %s18 = ssub.s32 %s13, 1
    %s19 = ssub.s32 %s13, 2
    %s20 = sadd.s32 %s13, 1
    %s21 = ssub.s32 %s13, %s20
    %p22 = scmp.eq.s32.totalorder %s21, 0
    %s24 = sadd.s32 %s23, 1
    %s25 = scalar_select %p22, %s23, %s24
    %p28 = pneg %p22
    %p29 = scmp.eq.s32.totalorder %s13, 1
    %p30 = por %p28, %p29
    %p31 = scmp.ne.s32.totalorder %s23, %s26
    %p32 = scmp.eq.s32.totalorder %s13, 0
    %p33 = por %p31, %p32
    %p34 = scmp.ne.s32.totalorder %s23, %s26
    %p35 = scmp.eq.s32.totalorder %s18, 1
    %p36 = por %p34, %p35
    %p37 = scmp.ne.s32.totalorder %s26, %s27
    %p38 = scmp.eq.s32.totalorder %s18, 0
    %p39 = por %p37, %p38
    %p40 = scmp.ne.s32.totalorder %s26, %s27
    %p41 = scmp.eq.s32.totalorder %s19, 1
    %p42 = por %p40, %p41
    %p44 = scmp.ne.s32.totalorder %s27, %s43
    %p45 = scmp.eq.s32.totalorder %s19, 0
    %p46 = por %p44, %p45
    %s48 = sadd.s32 %s47, 1
    %p51 = scmp.eq.s32.totalorder %s13, 1
    %p52 = scmp.ne.s32.totalorder %s47, %s49
    %p53 = scmp.eq.s32.totalorder %s13, 0
    %p54 = por %p52, %p53
    %p55 = scmp.ne.s32.totalorder %s47, %s49
    %p56 = scmp.eq.s32.totalorder %s18, 1
    %p57 = por %p55, %p56
    %p58 = scmp.ne.s32.totalorder %s49, %s50
    %p59 = scmp.eq.s32.totalorder %s18, 0
    %p60 = por %p58, %p59
    %p61 = scmp.ne.s32.totalorder %s49, %s50
    %p62 = scmp.eq.s32.totalorder %s19, 1
    %p63 = por %p61, %p62
    %p65 = scmp.ne.s32.totalorder %s50, %s64
    %p66 = scmp.eq.s32.totalorder %s19, 0
    %p67 = por %p65, %p66
    %s69 = sadd.s32 %s68, 1
    %p72 = scmp.eq.s32.totalorder %s13, 1
    %p73 = scmp.ne.s32.totalorder %s68, %s70
    %p74 = scmp.eq.s32.totalorder %s13, 0
    %p75 = por %p73, %p74
    %p76 = scmp.ne.s32.totalorder %s68, %s70
    %p77 = scmp.eq.s32.totalorder %s18, 1
    %p78 = por %p76, %p77
    %p79 = scmp.ne.s32.totalorder %s70, %s71
    %p80 = scmp.eq.s32.totalorder %s18, 0
    %p81 = por %p79, %p80
    %p82 = scmp.ne.s32.totalorder %s70, %s71
    %p83 = scmp.eq.s32.totalorder %s19, 1
    %p84 = por %p82, %p83
    %p86 = scmp.ne.s32.totalorder %s71, %s85
    %p87 = scmp.eq.s32.totalorder %s19, 0
    %p88 = por %p86, %p87
    %s90 = sadd.s32 %s89, 1
    %p93 = scmp.eq.s32.totalorder %s13, 1
    %p94 = scmp.ne.s32.totalorder %s89, %s91
    %p95 = scmp.eq.s32.totalorder %s13, 0
    %p96 = por %p94, %p95
    %p97 = scmp.ne.s32.totalorder %s89, %s91
    %p98 = scmp.eq.s32.totalorder %s18, 1
    %p99 = por %p97, %p98
    %p100 = scmp.ne.s32.totalorder %s91, %s92
    %p101 = scmp.eq.s32.totalorder %s18, 0
    %p102 = por %p100, %p101
    %p103 = scmp.ne.s32.totalorder %s91, %s92
    %p104 = scmp.eq.s32.totalorder %s19, 1
    %p105 = por %p103, %p104
    %p107 = scmp.ne.s32.totalorder %s92, %s106
    %p108 = scmp.eq.s32.totalorder %s19, 0
    %p109 = por %p107, %p108
    %s111 = sadd.s32 %s110, 1
    %p114 = scmp.eq.s32.totalorder %s13, 1
    %p115 = scmp.ne.s32.totalorder %s110, %s112
    %p116 = scmp.eq.s32.totalorder %s13, 0
    %p117 = por %p115, %p116
    %p118 = scmp.ne.s32.totalorder %s110, %s112
    %p119 = scmp.eq.s32.totalorder %s18, 1
    %p120 = por %p118, %p119
    %p121 = scmp.ne.s32.totalorder %s112, %s113
    %p122 = scmp.eq.s32.totalorder %s18, 0
    %p123 = por %p121, %p122
    %p124 = scmp.ne.s32.totalorder %s112, %s113
    %p125 = scmp.eq.s32.totalorder %s19, 1
    %p126 = por %p124, %p125
    %p128 = scmp.ne.s32.totalorder %s113, %s127
    %p129 = scmp.eq.s32.totalorder %s19, 0
    %p130 = por %p128, %p129
    %s132 = sadd.s32 %s131, 1
    %p135 = scmp.eq.s32.totalorder %s13, 1
    %p136 = scmp.ne.s32.totalorder %s131, %s133
    %p137 = scmp.eq.s32.totalorder %s13, 0
    %p138 = por %p136, %p137
    %p139 = scmp.ne.s32.totalorder %s131, %s133
    %p140 = scmp.eq.s32.totalorder %s18, 1
    %p141 = por %p139, %p140
    %p142 = scmp.ne.s32.totalorder %s133, %s134
    %p143 = scmp.eq.s32.totalorder %s18, 0
    %p144 = por %p142, %p143
    %p145 = scmp.ne.s32.totalorder %s133, %s134
    %p146 = scmp.eq.s32.totalorder %s19, 1
    %p147 = por %p145, %p146
    %p149 = scmp.ne.s32.totalorder %s134, %s148
    %p150 = scmp.eq.s32.totalorder %s19, 0
    %p151 = por %p149, %p150
    %s153 = sadd.s32 %s152, 1
    %p156 = scmp.eq.s32.totalorder %s13, 1
    %p157 = scmp.ne.s32.totalorder %s152, %s154
    %p158 = scmp.eq.s32.totalorder %s13, 0
    %p159 = por %p157, %p158
    %p160 = scmp.ne.s32.totalorder %s152, %s154
    %p161 = scmp.eq.s32.totalorder %s18, 1
    %p162 = por %p160, %p161
    %p163 = scmp.ne.s32.totalorder %s154, %s155
    %p164 = scmp.eq.s32.totalorder %s18, 0
    %p165 = por %p163, %p164
    %p166 = scmp.ne.s32.totalorder %s154, %s155
    %p167 = scmp.eq.s32.totalorder %s19, 1
    %p168 = por %p166, %p167
    %p170 = scmp.ne.s32.totalorder %s155, %s169
    %p171 = scmp.eq.s32.totalorder %s19, 0
    %p172 = por %p170, %p171
    %s173 = ssub.s32 %s13, %s20
    %p174 = scmp.eq.s32.totalorder %s173, 0
    %s176 = sadd.s32 %s175, 1
    %s177 = scalar_select %p174, %s175, %s176
    %p180 = pneg %p174
    %p181 = scmp.eq.s32.totalorder %s13, 1
    %p182 = por %p180, %p181
    %p183 = scmp.ne.s32.totalorder %s175, %s178
    %p184 = scmp.eq.s32.totalorder %s13, 0
    %p185 = por %p183, %p184
    %p186 = scmp.ne.s32.totalorder %s175, %s178
    %p187 = scmp.eq.s32.totalorder %s18, 1
    %p188 = por %p186, %p187
    %p189 = scmp.ne.s32.totalorder %s178, %s179
    %p190 = scmp.eq.s32.totalorder %s18, 0
    %p191 = por %p189, %p190
    %p192 = scmp.ne.s32.totalorder %s178, %s179
    %p193 = scmp.eq.s32.totalorder %s19, 1
    %p194 = por %p192, %p193
    %p196 = scmp.ne.s32.totalorder %s179, %s195
    %p197 = scmp.eq.s32.totalorder %s19, 0
    %p198 = por %p196, %p197
    %p199 = scmp.le.s32.totalorder 1, %s13
    %p200 = scmp.lt.s32.totalorder %s13, 3
    %p201 = pnand %p199, %p200
    %p202 = pneg %p201
    // Predicated region
    $region9: #{stream_forward.1} parent=5 // pred_check
      _
    $region10: #{stream_forward.1} parent=5 // pred_check_branch
      %204 = sbr.rel (%p201) target = $region12
    $region11: #{stream_forward.1} parent=5 // pred_region
      %s205 = ssub.s32 %s13, 1
      // Predicated region
      $region13: #{stream_forward.1} parent=11 // pred_check
        %p206 = pneg %p60
      $region14: #{stream_forward.1} parent=11 // pred_check_branch
        %208 = sbr.rel (%p206) target = $region16
      $region15: #{stream_forward.1} parent=11 // pred_region
        _
      $region16: #{stream_forward.1} parent=11 // pred_fallthru
        _
      // Predicated region
      $region17: #{stream_forward.1} parent=11 // pred_check
        %p209 = pneg %p81
      $region18: #{stream_forward.1} parent=11 // pred_check_branch
        %211 = sbr.rel (%p209) target = $region20
      $region19: #{stream_forward.1} parent=11 // pred_region
        _
      $region20: #{stream_forward.1} parent=11 // pred_fallthru
        _
      // Predicated region
      $region21: #{stream_forward.1} parent=11 // pred_check
        %p212 = pneg %p102
      $region22: #{stream_forward.1} parent=11 // pred_check_branch
        %214 = sbr.rel (%p212) target = $region24
      $region23: #{stream_forward.1} parent=11 // pred_region
        _
      $region24: #{stream_forward.1} parent=11 // pred_fallthru
        _
      // Predicated region
      $region25: #{stream_forward.1} parent=11 // pred_check
        %p215 = pneg %p123
      $region26: #{stream_forward.1} parent=11 // pred_check_branch
        %217 = sbr.rel (%p215) target = $region28
      $region27: #{stream_forward.1} parent=11 // pred_region
        _
      $region28: #{stream_forward.1} parent=11 // pred_fallthru
        _
      // Predicated region
      $region29: #{stream_forward.1} parent=11 // pred_check
        %p218 = pneg %p144
      $region30: #{stream_forward.1} parent=11 // pred_check_branch
        %220 = sbr.rel (%p218) target = $region32
      $region31: #{stream_forward.1} parent=11 // pred_region
        _
      $region32: #{stream_forward.1} parent=11 // pred_fallthru
        _
      // Predicated region
      $region33: #{stream_forward.1} parent=11 // pred_check
        %p221 = pneg %p165
      $region34: #{stream_forward.1} parent=11 // pred_check_branch
        %223 = sbr.rel (%p221) target = $region36
      $region35: #{stream_forward.1} parent=11 // pred_region
        _
      $region36: #{stream_forward.1} parent=11 // pred_fallthru
        _
    $region12: #{stream_forward.1} parent=5 // pred_fallthru
      _
    %p224 = scmp.lt.s32.totalorder %s13, 2
    // Predicated region
    $region37: #{stream_forward.1} parent=5 // pred_check
      %p225 = pneg %p224
    $region38: #{stream_forward.1} parent=5 // pred_check_branch
      %227 = sbr.rel (%p225) target = $region40
    $region39: #{stream_forward.1} parent=5 // pred_region
      // Predicated region
      $region41: #{stream_forward.1} parent=39 // pred_check
        %p228 = pneg %p33
      $region42: #{stream_forward.1} parent=39 // pred_check_branch
        %230 = sbr.rel (%p228) target = $region44
      $region43: #{stream_forward.1} parent=39 // pred_region
        %p231 = scmp.lt.s32.totalorder %s13, 1
        %s232 = scalar_select %p231, %s13, 1
        %s233 = smul.addr %s232, 3
        %s234 = smul.addr %s233, 4
        %s235 = scalar_lea.vmem %s0, %s234
      $region44: #{stream_forward.1} parent=39 // pred_fallthru
        _
    $region40: #{stream_forward.1} parent=5 // pred_fallthru
      _
    %p236 = scmp.le.s32.totalorder 1, %s13
    %p237 = scmp.lt.s32.totalorder %s13, 3
    %p238 = pnand %p236, %p237
    %p239 = pneg %p238
    // Predicated region
    $region45: #{stream_forward.1} parent=5 // pred_check
      _
    $region46: #{stream_forward.1} parent=5 // pred_check_branch
      %241 = sbr.rel (%p238) target = $region48
    $region47: #{stream_forward.1} parent=5 // pred_region
      %s242 = ssub.s32 %s13, 1
      %p243 = scmp.lt.s32.totalorder %s18, 1
      %s244 = scalar_select %p243, %s18, 1
      %s245 = smul.addr %s244, 3
      %s246 = smul.addr %s245, 4
      %s247 = scalar_lea.vmem %s0, %s246
      %p248 = pneg %p39
      %p249 = pneg %p36
      %p250 = pneg %p60
      %p251 = pneg %p57
      %p252 = pneg %p81
      %p253 = pneg %p78
      %p254 = pneg %p102
      %p255 = pneg %p99
      %p256 = pneg %p123
      %p257 = pneg %p120
      %p258 = pneg %p144
      %p259 = pneg %p141
      %p260 = pneg %p165
      %p261 = pneg %p162
      %p262 = pneg %p191
      %p263 = pneg %p188
      %p264 = scmp.lt.s32.totalorder %s18, 1
      %s265 = scalar_select %p264, %s18, 1
      %s266 = smul.addr %s265, 3
      %s267 = smul.addr %s266, 8
      %s268 = scalar_lea.vmem %s7, %s267
      %p269 = scmp.lt.s32.totalorder %s18, 1
      %s270 = scalar_select %p269, %s18, 1
      %s271 = smul.addr %s270, 3
      %s272 = smul.addr %s271, 4
      %s273 = scalar_lea.vmem %s0, %s272
      %p274 = scmp.lt.s32.totalorder %s18, 1
      %s275 = scalar_select %p274, %s18, 1
      %s276 = smul.addr %s275, 3
      %s277 = smul.addr %s276, 8
      %s278 = scalar_lea.vmem %s7, %s277
      %v280 = vld [vmem:[%s273] sm:$0xff]
      %v281 = vld [vmem:[%s273 + $0x8] sm:$0xf]
      %v282 = vunpack.c.l.bf16 %v280
      %v283 = vunpack.c.h.bf16 %v280
      %v284 = vunpack.c.l.bf16 %v281
      %v285 = vld [vmem:[%s1] sm:$0xff]
      %v286 = vadd.f32 %v282, %v283
      %v287 = vadd.f32 %v286, %v284
      %288 = vadd.xlane.f32.xlu0 %v287
      %v289 = vpop.xlane.xlu0 %288
      %v290 = vmul.f32 %v289, 0.00390625
      %v291 = vmul.f32 %v285, %v290
      %v292 = vld [vmem:[%s2] sm:$0xff]
      %v293 = vadd.f32 %v291, %v292
      %v294 = vld [vmem:[%s3] sm:$0xff]
      %v295 = vld [vmem:[%s4] sm:$0xff]
      %vm296 = vcmask 64512
      %v298 = vsel %vm296, %v294, 0
      %300 = vmatprep.subr.mxu0 0.0
      %301 = vmatpush1.msra.mxu0 %v293
      %302 = vmatprep.subr.mxu0 0.0
      %303 = vmatpush1.msra.mxu0 0.0
      %304 = vmatprep.subr.mxu0 0.0
      %305 = vmatpush1.msra.mxu0 0.0
      %306 = vmatprep.subr.mxu0 0.0
      %307 = vmatpush1.msra.mxu0 0.0
      %308 = vmatprep.subr.mxu0 0.0
      %309 = vmatpush1.msra.mxu0 0.0
      %310 = vmatprep.subr.mxu0 0.0
      %311 = vmatpush1.msra.mxu0 0.0
      %312 = vmatprep.subr.mxu0 0.0
      %313 = vmatpush1.msra.mxu0 0.0
      %314 = vmatprep.subr.mxu0 0.0
      %315 = vmatpush1.msra.mxu0 0.0
      %316 = vmatprep.subr.mxu0 0.0
      %317 = vmatpush1.msra.mxu0 0.0
      %318 = vmatprep.subr.mxu0 0.0
      %319 = vmatpush1.msra.mxu0 0.0
      %320 = vmatprep.subr.mxu0 0.0
      %321 = vmatpush1.msra.mxu0 0.0
      %322 = vmatprep.subr.mxu0 0.0
      %323 = vmatpush1.msra.mxu0 0.0
      %324 = vmatprep.subr.mxu0 0.0
      %325 = vmatpush1.msra.mxu0 0.0
      %326 = vmatprep.subr.mxu0 0.0
      %327 = vmatpush1.msra.mxu0 0.0
      %328 = vmatprep.subr.mxu0 0.0
      %329 = vmatpush1.msra.mxu0 0.0
      %330 = vmatprep.subr.mxu0 0.0
      %331 = vmatpush1.msra.mxu0 0.0
      %332 = vmatprep.subr.mxu0 0.0
      %333 = vmatpush1.msra.mxu0 0.0
      %334 = vmatprep.subr.mxu0 0.0
      %335 = vmatpush1.msra.mxu0 0.0
      %336 = vmatprep.subr.mxu0 0.0
      %337 = vmatpush1.msra.mxu0 0.0
      %338 = vmatprep.subr.mxu0 0.0
      %339 = vmatpush1.msra.mxu0 0.0
      %340 = vmatprep.subr.mxu0 0.0
      %341 = vmatpush1.msra.mxu0 0.0
      %342 = vmatprep.subr.mxu0 0.0
      %343 = vmatpush1.msra.mxu0 0.0
      %344 = vmatprep.subr.mxu0 0.0
      %345 = vmatpush1.msra.mxu0 0.0
      %346 = vmatprep.subr.mxu0 0.0
      %347 = vmatpush1.msra.mxu0 0.0
      %348 = vmatprep.subr.mxu0 0.0
      %349 = vmatpush1.msra.mxu0 0.0
      %350 = vmatprep.subr.mxu0 0.0
      %351 = vmatpush1.msra.mxu0 0.0
      %352 = vmatprep.subr.mxu0 0.0
      %353 = vmatpush1.msra.mxu0 0.0
      %354 = vmatprep.subr.mxu0 0.0
      %355 = vmatpush1.msra.mxu0 0.0
      %356 = vmatprep.subr.mxu0 0.0
      %357 = vmatpush1.msra.mxu0 0.0
      %358 = vmatprep.subr.mxu0 0.0
      %359 = vmatpush1.msra.mxu0 0.0
      %360 = vmatprep.subr.mxu0 0.0
      %361 = vmatpush1.msra.mxu0 0.0
      %362 = vmatprep.subr.mxu0 0.0
      %363 = vmatpush1.msra.mxu0 0.0
      %364 = vmatprep.mubr.f32.mxu0 0.0
      %365 = vmatmul.mubr.f32.gmra.mrb[0].mxu0 %v298
      %v366 = vpop.f32.mrb[0].mxu0
      %v367 = vadd.f32 %v295, %v366
      %v368 = vpop.f32.mrb[0].mxu0
      %369 = vdwg.mxu0
      %v370 = vxor.u32 %v367, 2147483648
      %v371 = vmul.f32 %v370, 1.442695
      %v372 = vpow.pop %v371
      %v373 = vadd.f32 %v372, 1.0
      %v374 = vrcp.pop %v373
      %v375 = vmul.f32 1.0, %v374
      %377 = vset.pattern.permute.xlu0 0
      %378 = vperm.xlu0 %377, %v285
      %v379 = vpop.permute.xlu0 %378
      %v381 = vmul.f32 %v282, %v379
      %v382 = vmul.f32 %v283, %v379
      %v383 = vmul.f32 %v284, %v379
      %385 = vset.pattern.permute.xlu0 0
      %386 = vperm.xlu0 %385, %v292
      %v387 = vpop.permute.xlu0 %386
      %v389 = vadd.f32 %v381, %v387
      %v390 = vadd.f32 %v382, %v387
      %v391 = vadd.f32 %v383, %v387
      %393 = vset.pattern.permute.xlu0 0
      %394 = vperm.xlu0 %393, %v375
      %v395 = vpop.permute.xlu0 %394
      %v397 = vmul.f32 %v389, %v395
      %v398 = vmul.f32 %v390, %v395
      %v399 = vmul.f32 %v391, %v395
      %400 = vrot.lane.b32.xlu0 %v282, 19
      %v401 = vpop.permute.xlu0 %400
      %402 = vrot.lane.b32.xlu0 %v283, 19
      %v403 = vpop.permute.xlu0 %402
      %404 = vrot.lane.b32.xlu0 %v284, 19
      %v405 = vpop.permute.xlu0 %404
      %v406 = vlaneseq
      %v407 = vand.u32 %v406, 127
      %vm408 = vcmp.lt.s32.totalorder %v407, 19
      %v409 = vsel %vm408, %v403, %v405
      %v410 = vsel %vm408, %v401, %v403
      %v411 = vsel %vm408, %v405, %v401
      %412 = vrot.lane.b32.xlu0 %v282, 18
      %v413 = vpop.permute.xlu0 %412
      %414 = vrot.lane.b32.xlu0 %v283, 18
      %v415 = vpop.permute.xlu0 %414
      %416 = vrot.lane.b32.xlu0 %v284, 18
      %v417 = vpop.permute.xlu0 %416
      %vm418 = vcmp.lt.s32.totalorder %v407, 18
      %v419 = vsel %vm418, %v415, %v417
      %v420 = vsel %vm418, %v413, %v415
      %v421 = vsel %vm418, %v417, %v413
      %422 = vrot.lane.b32.xlu0 %v282, 17
      %v423 = vpop.permute.xlu0 %422
      %424 = vrot.lane.b32.xlu0 %v283, 17
      %v425 = vpop.permute.xlu0 %424
      %426 = vrot.lane.b32.xlu0 %v284, 17
      %v427 = vpop.permute.xlu0 %426
      %vm428 = vcmp.lt.s32.totalorder %v407, 17
      %v429 = vsel %vm428, %v425, %v427
      %v430 = vsel %vm428, %v423, %v425
      %v431 = vsel %vm428, %v427, %v423
      %432 = vrot.lane.b32.xlu0 %v282, 1
      %v433 = vpop.permute.xlu0 %432
      %434 = vrot.lane.b32.xlu0 %v283, 1
      %v435 = vpop.permute.xlu0 %434
      %436 = vrot.lane.b32.xlu0 %v284, 1
      %v437 = vpop.permute.xlu0 %436
      %vm438 = vcmp.lt.s32.totalorder %v407, 1
      %v439 = vsel %vm438, %v435, %v437
      %v440 = vsel %vm438, %v433, %v435
      %v441 = vsel %vm438, %v437, %v433
      %442 = vrot.lane.b32.xlu0 %v282, 127
      %v443 = vpop.permute.xlu0 %442
      %444 = vrot.lane.b32.xlu0 %v283, 127
      %v445 = vpop.permute.xlu0 %444
      %446 = vrot.lane.b32.xlu0 %v284, 127
      %v447 = vpop.permute.xlu0 %446
      %vm448 = vcmp.lt.s32.totalorder %v407, 127
      %v449 = vsel %vm448, %v445, %v447
      %v450 = vsel %vm448, %v443, %v445
      %v451 = vsel %vm448, %v447, %v443
      %452 = vrot.lane.b32.xlu0 %v282, 111
      %v453 = vpop.permute.xlu0 %452
      %454 = vrot.lane.b32.xlu0 %v283, 111
      %v455 = vpop.permute.xlu0 %454
      %456 = vrot.lane.b32.xlu0 %v284, 111
      %v457 = vpop.permute.xlu0 %456
      %vm458 = vcmp.lt.s32.totalorder %v407, 111
      %v459 = vsel %vm458, %v455, %v457
      %v460 = vsel %vm458, %v453, %v455
      %v461 = vsel %vm458, %v457, %v453
      %462 = vrot.lane.b32.xlu0 %v282, 110
      %v463 = vpop.permute.xlu0 %462
      %464 = vrot.lane.b32.xlu0 %v283, 110
      %v465 = vpop.permute.xlu0 %464
      %466 = vrot.lane.b32.xlu0 %v284, 110
      %v467 = vpop.permute.xlu0 %466
      %vm468 = vcmp.lt.s32.totalorder %v407, 110
      %v469 = vsel %vm468, %v465, %v467
      %v470 = vsel %vm468, %v463, %v465
      %v471 = vsel %vm468, %v467, %v463
      %472 = vrot.lane.b32.xlu0 %v282, 109
      %v473 = vpop.permute.xlu0 %472
      %474 = vrot.lane.b32.xlu0 %v283, 109
      %v475 = vpop.permute.xlu0 %474
      %476 = vrot.lane.b32.xlu0 %v284, 109
      %v477 = vpop.permute.xlu0 %476
      %vm478 = vcmp.lt.s32.totalorder %v407, 109
      %v479 = vsel %vm478, %v475, %v477
      %v480 = vsel %vm478, %v473, %v475
      %v481 = vsel %vm478, %v477, %v473
      %v482 = vpack.c.bf16 %v421, %v411
      %v483 = vpack.c.bf16 %v420, %v410
      %v484 = vpack.c.bf16 %v419, %v409
      %v485 = vpack.c.bf16 %v441, %v431
      %v486 = vpack.c.bf16 %v440, %v430
      %v487 = vpack.c.bf16 %v439, %v429
      %v488 = vpack.c.bf16 %v450, %v282
      %v489 = vpack.c.bf16 %v449, %v283
      %v490 = vpack.c.bf16 %v451, %v284
      %v491 = vpack.c.bf16 %v470, %v460
      %v492 = vpack.c.bf16 %v469, %v459
      %v493 = vpack.c.bf16 %v471, %v461
      %v494 = vpack.c.bf16 %v480, %v480
      %v495 = vpack.c.bf16 %v479, %v479
      %v496 = vpack.c.bf16 %v481, %v481
      %v497 = vld [vmem:[%s5] sm:$0xf]
      %v498 = vld [vmem:[%s6] sm:$0xff]
      %500 = vset.pattern.permute.xlu0 0
      %501 = vperm.xlu0 %500, %v498
      %v502 = vpop.permute.xlu0 %501
      %vm504 = vcmask 588800
      %v506 = vsel %vm504, %v497, 0
      %vm508 = vcmask 1043456
      %v510 = vsel %vm508, %v494, 0
      %v513 = vsel %vm508, %v495, 0
      %v516 = vsel %vm508, %v496, 0
      %518 = vmatprep.subr.bf16.mxu0 %v483
      %519 = vmatpush1.bf16.msra.mxu0 %v482
      %520 = vmatprep.subr.bf16.mxu0 %v486
      %521 = vmatpush1.bf16.msra.mxu0 %v485
      %522 = vmatprep.subr.bf16.mxu0 %v489
      %523 = vmatpush1.bf16.msra.mxu0 %v488
      %524 = vmatprep.subr.bf16.mxu0 %v492
      %525 = vmatpush1.bf16.msra.mxu0 %v491
      %526 = vmatprep.subr.bf16.mxu0 %v513
      %527 = vmatpush1.bf16.msra.mxu0 %v510
      %528 = vmatprep.subr.bf16.mxu0 0
      %529 = vmatpush1.bf16.msra.mxu0 0
      %530 = vmatprep.subr.bf16.mxu0 0
      %531 = vmatpush1.bf16.msra.mxu0 0
      %532 = vmatprep.subr.bf16.mxu0 0
      %533 = vmatpush1.bf16.msra.mxu0 0
      %534 = vmatprep.subr.bf16.mxu0 0
      %535 = vmatpush1.bf16.msra.mxu0 0
      %536 = vmatprep.subr.bf16.mxu0 0
      %537 = vmatpush1.bf16.msra.mxu0 0
      %538 = vmatprep.subr.bf16.mxu0 0
      %539 = vmatpush1.bf16.msra.mxu0 0
      %540 = vmatprep.subr.bf16.mxu0 0
      %541 = vmatpush1.bf16.msra.mxu0 0
      %542 = vmatprep.subr.bf16.mxu0 0
      %543 = vmatpush1.bf16.msra.mxu0 0
      %544 = vmatprep.subr.bf16.mxu0 0
      %545 = vmatpush1.bf16.msra.mxu0 0
      %546 = vmatprep.subr.bf16.mxu0 0
      %547 = vmatpush1.bf16.msra.mxu0 0
      %548 = vmatprep.subr.bf16.mxu0 0
      %549 = vmatpush1.bf16.msra.mxu0 0
      %550 = vmatprep.mubr.bf16.mxu0 0
      %551 = vmatmul.mubr.bf16.gmra.mrb[0].mxu0 %v506
      %v552 = vpop.f32.mrb[0].mxu0
      %v553 = vadd.f32 %v502, %v552
      %v554 = vpop.f32.mrb[0].mxu0
      %v555 = vadd.f32 %v502, %v554
      %v556 = vpop.f32.mrb[0].mxu0
      %v557 = vpop.f32.mrb[0].mxu0
      %558 = vdwg.mxu0
      %559 = vmatprep.subr.bf16.mxu0 0
      %560 = vmatpush1.bf16.msra.mxu0 %v484
      %561 = vmatprep.subr.bf16.mxu0 0
      %562 = vmatpush1.bf16.msra.mxu0 %v487
      %563 = vmatprep.subr.bf16.mxu0 0
      %564 = vmatpush1.bf16.msra.mxu0 %v490
      %565 = vmatprep.subr.bf16.mxu0 0
      %566 = vmatpush1.bf16.msra.mxu0 %v493
      %567 = vmatprep.subr.bf16.mxu0 0
      %568 = vmatpush1.bf16.msra.mxu0 %v516
      %569 = vmatprep.subr.bf16.mxu0 0
      %570 = vmatpush1.bf16.msra.mxu0 0
      %571 = vmatprep.subr.bf16.mxu0 0
      %572 = vmatpush1.bf16.msra.mxu0 0
      %573 = vmatprep.subr.bf16.mxu0 0
      %574 = vmatpush1.bf16.msra.mxu0 0
      %575 = vmatprep.subr.bf16.mxu0 0
      %576 = vmatpush1.bf16.msra.mxu0 0
      %577 = vmatprep.subr.bf16.mxu0 0
      %578 = vmatpush1.bf16.msra.mxu0 0
      %579 = vmatprep.subr.bf16.mxu0 0
      %580 = vmatpush1.bf16.msra.mxu0 0
      %581 = vmatprep.subr.bf16.mxu0 0
      %582 = vmatpush1.bf16.msra.mxu0 0
      %583 = vmatprep.subr.bf16.mxu0 0
      %584 = vmatpush1.bf16.msra.mxu0 0
      %585 = vmatprep.subr.bf16.mxu0 0
      %586 = vmatpush1.bf16.msra.mxu0 0
      %587 = vmatprep.subr.bf16.mxu0 0
      %588 = vmatpush1.bf16.msra.mxu0 0
      %589 = vmatprep.subr.bf16.mxu0 0
      %590 = vmatpush1.bf16.msra.mxu0 0
      %591 = vmatprep.mubr.bf16.mxu0 0
      %592 = vmatmul.mubr.bf16.gmra.mrb[0].mxu0 %v506
      %v593 = vpop.f32.mrb[0].mxu0
      %v594 = vadd.f32 %v502, %v593
      %v595 = vpop.f32.mrb[0].mxu0
      %v596 = vpop.f32.mrb[0].mxu0
      %v597 = vpop.f32.mrb[0].mxu0
      %598 = vdwg.mxu0
      %v599 = vadd.f32 %v397, %v553
      %v600 = vadd.f32 %v398, %v555
      %v601 = vadd.f32 %v399, %v594
      %v602 = vxor.u32 %v599, 2147483648
      %v603 = vxor.u32 %v600, 2147483648
      %v604 = vxor.u32 %v601, 2147483648
      %v605 = vmul.f32 %v602, 1.442695
      %v606 = vpow.pop %v605
      %v607 = vmul.f32 %v603, 1.442695
      %v608 = vpow.pop %v607
      %v609 = vmul.f32 %v604, 1.442695
      %v610 = vpow.pop %v609
      %v611 = vadd.f32 %v606, 1.0
      %v612 = vadd.f32 %v608, 1.0
      %v613 = vadd.f32 %v610, 1.0
      %v614 = vrcp.pop %v611
      %v615 = vmul.f32 1.0, %v614
      %v616 = vrcp.pop %v612
      %v617 = vmul.f32 1.0, %v616
      %v618 = vrcp.pop %v613
      %v619 = vmul.f32 1.0, %v618
      %v620 = vmul.f32 %v599, %v615
      %v621 = vmul.f32 %v600, %v617
      %v622 = vmul.f32 %v601, %v619
      %623 = vst [vmem:[%s278] sm:$0xff] %v620
      %624 = vst [vmem:[%s278 + $0x8] sm:$0xff] %v621
      %625 = vst [vmem:[%s278 + $0x10] sm:$0xff] %v622
      %p626 = scmp.lt.s32.totalorder %s18, 1
      %s627 = scalar_select %p626, %s18, 1
      %s628 = smul.addr %s627, 3
      %s629 = smul.addr %s628, 8
      %s630 = scalar_lea.vmem %s7, %s629
      // Predicated region
      $region49: #{stream_forward.1} parent=47 // pred_check
        %p631 = pneg %p188
      $region50: #{stream_forward.1} parent=47 // pred_check_branch
        %633 = sbr.rel (%p631) target = $region52
      $region51: #{stream_forward.1} parent=47 // pred_region
        _
      $region52: #{stream_forward.1} parent=47 // pred_fallthru
        _
    $region48: #{stream_forward.1} parent=5 // pred_fallthru
      _
    %p634 = scmp.le.s32.totalorder 2, %s13
    // Predicated region
    $region53: #{stream_forward.1} parent=5 // pred_check
      %p635 = pneg %p634
    $region54: #{stream_forward.1} parent=5 // pred_check_branch
      %637 = sbr.rel (%p635) target = $region56
    $region55: #{stream_forward.1} parent=5 // pred_region
      %s638 = ssub.s32 %s13, 2
      // Predicated region
      $region57: #{stream_forward.1} parent=55 // pred_check
        %p639 = pneg %p194
      $region58: #{stream_forward.1} parent=55 // pred_check_branch
        %641 = sbr.rel (%p639) target = $region60
      $region59: #{stream_forward.1} parent=55 // pred_region
        %p642 = scmp.lt.s32.totalorder %s19, 1
        %s643 = scalar_select %p642, %s19, 1
        %s644 = smul.addr %s643, 3
        %s645 = smul.addr %s644, 8
        %s646 = scalar_lea.vmem %s7, %s645
      $region60: #{stream_forward.1} parent=55 // pred_fallthru
        _
    $region56: #{stream_forward.1} parent=5 // pred_fallthru
      _
  $region6: #{stream_forward.1} parent=0 // loop_footer
    %s17 = sadd.s32 1, %s13
  $region7: #{stream_forward.1} parent=0 // loop_footer_branch
    %12 = sbr.rel target = $region3
  $region8: #{stream_forward.1} parent=0 // loop_exit
    _

</llo_original>
